<compile_context>
chip_gen: v6e
topology: v6e:2x2x1
jax: 0.10.0
libtpu: 0.0.40
codegen_flags: <defaults>
</compile_context>

<pallas_src>
import functools
import math

import jax
import jax.numpy as jnp
from jax import lax
from jax.experimental import pallas as pl
from jax.experimental.pallas import tpu as pltpu


# ----------------------------------------------------------------------------
# Fused kernel: one batch element per grid step.
#   packed QKV projection -> per-head causal softmax attention -> head concat
#   -> output projection, all inside one kernel invocation.
# ----------------------------------------------------------------------------
def _fused_mha_kernel(x_ref, wqkv_ref, wout_ref, bout_ref, o_ref, *,
                      num_heads, d_out):
    x = x_ref[0]                       # (T, d_in)
    wqkv = wqkv_ref[...]               # (d_in, 3*H*d_out)

    T = x.shape[0]
    hd = num_heads * d_out
    scale = 1.0 / math.sqrt(d_out)

    # One packed projection for Q, K and V of every head: (T, 3*H*d_out).
    qkv = jnp.dot(x, wqkv, preferred_element_type=jnp.float32)
    q_all = qkv[:, 0 * hd:1 * hd]
    k_all = qkv[:, 1 * hd:2 * hd]
    v_all = qkv[:, 2 * hd:3 * hd]

    # Causal mask, shared by all heads.
    row = lax.broadcasted_iota(jnp.int32, (T, T), 0)
    col = lax.broadcasted_iota(jnp.int32, (T, T), 1)
    causal = col > row

    ctx_heads = []
    for h in range(num_heads):                      # H is small -> unrolled
        q = q_all[:, h * d_out:(h + 1) * d_out]     # (T, d_out)
        k = k_all[:, h * d_out:(h + 1) * d_out]
        v = v_all[:, h * d_out:(h + 1) * d_out]

        # scores = q @ k^T, contraction on the last dims (no explicit .T).
        scores = lax.dot_general(
            q, k, dimension_numbers=(((1,), (1,)), ((), ())),
            preferred_element_type=jnp.float32)     # (T, T)
        scores = scores * scale                     # scale before masking
        scores = jnp.where(causal, -jnp.inf, scores)

        # numerically stable softmax (f32), reciprocal on the EUP.
        m = jnp.max(scores, axis=-1, keepdims=True)
        p = jnp.exp(scores - m)
        denom = jnp.sum(p, axis=-1, keepdims=True)
        w = p * pl.reciprocal(denom, approx=True)

        ctx_heads.append(jnp.dot(w, v, preferred_element_type=jnp.float32))

    ctx = jnp.concatenate(ctx_heads, axis=-1)       # (T, H*d_out), lane-dense

    # Fused output projection: y = ctx @ W_out + b_out
    y = jnp.dot(ctx, wout_ref[...], preferred_element_type=jnp.float32)
    y = y + bout_ref[...]
    o_ref[0] = y.astype(o_ref.dtype)


# ----------------------------------------------------------------------------
# Wrapper: packs per-head weights once, launches one pallas_call over (B,).
# ----------------------------------------------------------------------------
def multi_head_attention_wrapper(x, params):
    """x: (B, T, d_in); wq/wk/wv: (H, d_in, d_out); w_out: (D, D); b_out: (1, D)."""
    B, T, d_in = x.shape
    wq, wk, wv = params["wq"], params["wk"], params["wv"]
    H, _, d_out = wq.shape
    D = H * d_out

    # Pack the three projections into one (d_in, 3*H*d_out) matrix:
    # lane layout = [Q_h0..Q_h{H-1} | K_h0..K_h{H-1} | V_h0..V_h{H-1}].
    def _stack(w):  # (H, d_in, d_out) -> (d_in, H*d_out)
        return jnp.transpose(w, (1, 0, 2)).reshape(d_in, H * d_out)

    w_qkv = jnp.concatenate([_stack(wq), _stack(wk), _stack(wv)], axis=-1)

    kernel = functools.partial(_fused_mha_kernel, num_heads=H, d_out=d_out)

    return pl.pallas_call(
        kernel,
        out_shape=jax.ShapeDtypeStruct((B, T, D), jnp.float32),
        grid_spec=pltpu.PrefetchScalarGridSpec(
            num_scalar_prefetch=0,
            grid=(B,),
            in_specs=[
                pl.BlockSpec((1, T, d_in), lambda b: (b, 0, 0)),   # x
                pl.BlockSpec((d_in, 3 * D), lambda b: (0, 0)),     # packed Wqkv (resident)
                pl.BlockSpec((D, D), lambda b: (0, 0)),            # W_out (resident)
                pl.BlockSpec((1, D), lambda b: (0, 0)),            # b_out (resident)
            ],
            out_specs=pl.BlockSpec((1, T, D), lambda b: (b, 0, 0)),
        ),
        compiler_params=pltpu.CompilerParams(
            dimension_semantics=("parallel",)),   # shards batch across TCs on v7x
    )(x, w_qkv, params["w_out"], params["b_out"])


# ----------------------------------------------------------------------------
# Pure-JAX reference (matches the PyTorch module in eval mode)
# ----------------------------------------------------------------------------
def reference(x, params):
    wq, wk, wv = params["wq"], params["wk"], params["wv"]
    H, d_in, d_out = wq.shape
    B, T, _ = x.shape
    outs = []
    mask = jnp.triu(jnp.ones((T, T), bool), k=1)
    for h in range(H):
        q = x @ wq[h]
        k = x @ wk[h]
        v = x @ wv[h]
        s = q @ jnp.swapaxes(k, 1, 2)
        s = jnp.where(mask[None], -jnp.inf, s)
        w = jax.nn.softmax(s / math.sqrt(d_out), axis=-1)
        outs.append(w @ v)
    ctx = jnp.concatenate(outs, axis=-1)
    return ctx @ params["w_out"] + params["b_out"][0]


if __name__ == "__main__":
    # Small shapes consistent with the module.
    B, T, d_in, d_out, H = 2, 8, 32, 16, 2
    D = H * d_out

    key = jax.random.PRNGKey(0)
    kx, kq, kk, kv, kw, kb = jax.random.split(key, 6)

    x = jax.random.normal(kx, (B, T, d_in), dtype=jnp.float32)

    scale_in = 1.0 / math.sqrt(d_in)
    scale_D = 1.0 / math.sqrt(D)
    params = {
        # qkv_bias=False -> no biases for the per-head projections
        "wq": jax.random.uniform(kq, (H, d_in, d_out), jnp.float32, -scale_in, scale_in),
        "wk": jax.random.uniform(kk, (H, d_in, d_out), jnp.float32, -scale_in, scale_in),
        "wv": jax.random.uniform(kv, (H, d_in, d_out), jnp.float32, -scale_in, scale_in),
        "w_out": jax.random.uniform(kw, (D, D), jnp.float32, -scale_D, scale_D),
        "b_out": jax.random.uniform(kb, (1, D), jnp.float32, -scale_D, scale_D),
    }

    y = multi_head_attention_wrapper(x, params)
    y = jax.block_until_ready(y)

    y_ref = reference(x, params)
    assert y.shape == (B, T, D)
    # tolerance relaxed slightly because of the approx (EUP) softmax reciprocal
    assert jnp.allclose(y, y_ref, atol=5e-3, rtol=5e-3), "mismatch vs reference"

    print("KERNEL_OK")
</pallas_src>

<mosaic_0001>
module attributes {stable_mosaic.version = 11 : i64} {
  func.func @_fused_mha_kernel(%arg0: i32, %arg1: memref<1x8x32xf32, #tpu.memory_space<vmem>>, %arg2: memref<32x96xf32, #tpu.memory_space<vmem>>, %arg3: memref<32x32xf32, #tpu.memory_space<vmem>>, %arg4: memref<1x32xf32, #tpu.memory_space<vmem>>, %arg5: memref<1x8x32xf32, #tpu.memory_space<vmem>>) attributes {dimension_semantics = [#tpu.dimension_semantics<parallel>], iteration_bounds = array<i64: 2>, scalar_prefetch = 0 : i64, scratch_operands = 0 : i64, tpu.core_type = #tpu.core_type<tc>, window_params = [{transform_indices = @transform_0, window_bounds = array<i64: 1, 8, 32>}, {pipeline_mode = #tpu.pipeline_mode<synchronous>, transform_indices = @transform_1, window_bounds = array<i64: 32, 96>}, {pipeline_mode = #tpu.pipeline_mode<synchronous>, transform_indices = @transform_2, window_bounds = array<i64: 32, 32>}, {pipeline_mode = #tpu.pipeline_mode<synchronous>, transform_indices = @transform_3, window_bounds = array<i64: 1, 32>}, {transform_indices = @transform_4, window_bounds = array<i64: 1, 8, 32>}]} {
    %c0 = arith.constant 0 : index
    %c0_0 = arith.constant 0 : index
    %c0_1 = arith.constant 0 : index
    %0 = vector.load %arg1[%c0, %c0_0, %c0_1] : memref<1x8x32xf32, #tpu.memory_space<vmem>>, vector<1x8x32xf32>
    %1 = vector.shape_cast %0 : vector<1x8x32xf32> to vector<8x32xf32>
    %c0_2 = arith.constant 0 : index
    %c0_3 = arith.constant 0 : index
    %2 = vector.load %arg2[%c0_2, %c0_3] : memref<32x96xf32, #tpu.memory_space<vmem>>, vector<32x96xf32>
    %cst = arith.constant dense<0.000000e+00> : vector<8x96xf32>
    %3 = tpu.matmul %1, %2, %cst {dimension_numbers = #tpu.dot_dimension_numbers<[1], [0], [0], [1], [0, 0, 1, 1], [], []>} : vector<8x32xf32>, vector<32x96xf32>, vector<8x96xf32> -> vector<8x96xf32>
    %4 = vector.extract_strided_slice %3 {offsets = [0, 0], sizes = [8, 32], strides = [1, 1]} : vector<8x96xf32> to vector<8x32xf32>
    %5 = vector.extract_strided_slice %3 {offsets = [0, 32], sizes = [8, 32], strides = [1, 1]} : vector<8x96xf32> to vector<8x32xf32>
    %6 = vector.extract_strided_slice %3 {offsets = [0, 64], sizes = [8, 32], strides = [1, 1]} : vector<8x96xf32> to vector<8x32xf32>
    %7 = tpu.iota {dimensions = array<i32: 0>} : vector<8x8xi32>
    %8 = tpu.iota {dimensions = array<i32: 1>} : vector<8x8xi32>
    %9 = arith.cmpi sgt, %8, %7 : vector<8x8xi32>
    %10 = vector.extract_strided_slice %4 {offsets = [0, 0], sizes = [8, 16], strides = [1, 1]} : vector<8x32xf32> to vector<8x16xf32>
    %11 = vector.extract_strided_slice %5 {offsets = [0, 0], sizes = [8, 16], strides = [1, 1]} : vector<8x32xf32> to vector<8x16xf32>
    %12 = vector.extract_strided_slice %6 {offsets = [0, 0], sizes = [8, 16], strides = [1, 1]} : vector<8x32xf32> to vector<8x16xf32>
    %cst_4 = arith.constant dense<0.000000e+00> : vector<8x8xf32>
    %13 = tpu.matmul %10, %11, %cst_4 {dimension_numbers = #tpu.dot_dimension_numbers<[1], [1], [0], [0], [0, 0, 1, 0], [], []>} : vector<8x16xf32>, vector<8x16xf32>, vector<8x8xf32> -> vector<8x8xf32>
    %cst_5 = arith.constant 2.500000e-01 : f32
    %14 = vector.broadcast %cst_5 : f32 to vector<8x8xf32>
    %15 = arith.mulf %13, %14 : vector<8x8xf32>
    %cst_6 = arith.constant 0xFF800000 : f32
    %16 = vector.broadcast %cst_6 : f32 to vector<8x8xf32>
    %17 = arith.select %9, %16, %15 : vector<8x8xi1>, vector<8x8xf32>
    %cst_7 = arith.constant dense<0xFF800000> : vector<8xf32>
    %18 = vector.multi_reduction <maximumf>, %17, %cst_7 [1] : vector<8x8xf32> to vector<8xf32>
    %19 = vector.shape_cast %18 : vector<8xf32> to vector<8x1xf32>
    %20 = vector.broadcast %19 : vector<8x1xf32> to vector<8x8xf32>
    %21 = arith.subf %17, %20 : vector<8x8xf32>
    %22 = math.exp %21 : vector<8x8xf32>
    %cst_8 = arith.constant dense<0.000000e+00> : vector<8xf32>
    %23 = vector.multi_reduction <add>, %22, %cst_8 [1] : vector<8x8xf32> to vector<8xf32>
    %24 = vector.shape_cast %23 : vector<8xf32> to vector<8x1xf32>
    %25 = tpu.reciprocal %24 {approx = true} : vector<8x1xf32> -> vector<8x1xf32>
    %26 = vector.broadcast %25 : vector<8x1xf32> to vector<8x8xf32>
    %27 = arith.mulf %22, %26 : vector<8x8xf32>
    %cst_9 = arith.constant dense<0.000000e+00> : vector<8x16xf32>
    %28 = tpu.matmul %27, %12, %cst_9 {dimension_numbers = #tpu.dot_dimension_numbers<[1], [0], [0], [1], [0, 0, 1, 1], [], []>} : vector<8x8xf32>, vector<8x16xf32>, vector<8x16xf32> -> vector<8x16xf32>
    %29 = vector.extract_strided_slice %4 {offsets = [0, 16], sizes = [8, 16], strides = [1, 1]} : vector<8x32xf32> to vector<8x16xf32>
    %30 = vector.extract_strided_slice %5 {offsets = [0, 16], sizes = [8, 16], strides = [1, 1]} : vector<8x32xf32> to vector<8x16xf32>
    %31 = vector.extract_strided_slice %6 {offsets = [0, 16], sizes = [8, 16], strides = [1, 1]} : vector<8x32xf32> to vector<8x16xf32>
    %cst_10 = arith.constant dense<0.000000e+00> : vector<8x8xf32>
    %32 = tpu.matmul %29, %30, %cst_10 {dimension_numbers = #tpu.dot_dimension_numbers<[1], [1], [0], [0], [0, 0, 1, 0], [], []>} : vector<8x16xf32>, vector<8x16xf32>, vector<8x8xf32> -> vector<8x8xf32>
    %cst_11 = arith.constant 2.500000e-01 : f32
    %33 = vector.broadcast %cst_11 : f32 to vector<8x8xf32>
    %34 = arith.mulf %32, %33 : vector<8x8xf32>
    %cst_12 = arith.constant 0xFF800000 : f32
    %35 = vector.broadcast %cst_12 : f32 to vector<8x8xf32>
    %36 = arith.select %9, %35, %34 : vector<8x8xi1>, vector<8x8xf32>
    %cst_13 = arith.constant dense<0xFF800000> : vector<8xf32>
    %37 = vector.multi_reduction <maximumf>, %36, %cst_13 [1] : vector<8x8xf32> to vector<8xf32>
    %38 = vector.shape_cast %37 : vector<8xf32> to vector<8x1xf32>
    %39 = vector.broadcast %38 : vector<8x1xf32> to vector<8x8xf32>
    %40 = arith.subf %36, %39 : vector<8x8xf32>
    %41 = math.exp %40 : vector<8x8xf32>
    %cst_14 = arith.constant dense<0.000000e+00> : vector<8xf32>
    %42 = vector.multi_reduction <add>, %41, %cst_14 [1] : vector<8x8xf32> to vector<8xf32>
    %43 = vector.shape_cast %42 : vector<8xf32> to vector<8x1xf32>
    %44 = tpu.reciprocal %43 {approx = true} : vector<8x1xf32> -> vector<8x1xf32>
    %45 = vector.broadcast %44 : vector<8x1xf32> to vector<8x8xf32>
    %46 = arith.mulf %41, %45 : vector<8x8xf32>
    %cst_15 = arith.constant dense<0.000000e+00> : vector<8x16xf32>
    %47 = tpu.matmul %46, %31, %cst_15 {dimension_numbers = #tpu.dot_dimension_numbers<[1], [0], [0], [1], [0, 0, 1, 1], [], []>} : vector<8x8xf32>, vector<8x16xf32>, vector<8x16xf32> -> vector<8x16xf32>
    %48 = tpu.concatenate %28, %47 in 1 : vector<8x16xf32>, vector<8x16xf32> -> vector<8x32xf32>
    %c0_16 = arith.constant 0 : index
    %c0_17 = arith.constant 0 : index
    %49 = vector.load %arg3[%c0_16, %c0_17] : memref<32x32xf32, #tpu.memory_space<vmem>>, vector<32x32xf32>
    %cst_18 = arith.constant dense<0.000000e+00> : vector<8x32xf32>
    %50 = tpu.matmul %48, %49, %cst_18 {dimension_numbers = #tpu.dot_dimension_numbers<[1], [0], [0], [1], [0, 0, 1, 1], [], []>} : vector<8x32xf32>, vector<32x32xf32>, vector<8x32xf32> -> vector<8x32xf32>
    %c0_19 = arith.constant 0 : index
    %c0_20 = arith.constant 0 : index
    %51 = vector.load %arg4[%c0_19, %c0_20] : memref<1x32xf32, #tpu.memory_space<vmem>>, vector<1x32xf32>
    %52 = vector.broadcast %51 : vector<1x32xf32> to vector<8x32xf32>
    %53 = arith.addf %50, %52 : vector<8x32xf32>
    %c0_21 = arith.constant 0 : index
    %c0_22 = arith.constant 0 : index
    %c0_23 = arith.constant 0 : index
    %54 = vector.load %arg5[%c0_21, %c0_22, %c0_23] : memref<1x8x32xf32, #tpu.memory_space<vmem>>, vector<1x8x32xf32>
    %55 = vector.shape_cast %54 : vector<1x8x32xf32> to vector<8x32xf32>
    %56 = vector.shape_cast %53 : vector<8x32xf32> to vector<1x8x32xf32>
    tpu.vector_store %arg5[%c0_21, %c0_22, %c0_23], %56 {strides = array<i32>} : memref<1x8x32xf32, #tpu.memory_space<vmem>>, vector<1x8x32xf32>,
    return
  }
  func.func @transform_0(%arg0: i32) -> (i32, i32, i32) {
    %c0_i32 = arith.constant 0 : i32
    %c0_i32_0 = arith.constant 0 : i32
    %c0_i32_1 = arith.constant 0 : i32
    return %arg0, %c0_i32, %c0_i32_0 : i32, i32, i32
  }
  func.func @transform_1(%arg0: i32) -> (i32, i32) {
    %c0_i32 = arith.constant 0 : i32
    %c0_i32_0 = arith.constant 0 : i32
    %c0_i32_1 = arith.constant 0 : i32
    return %c0_i32, %c0_i32_0 : i32, i32
  }
  func.func @transform_2(%arg0: i32) -> (i32, i32) {
    %c0_i32 = arith.constant 0 : i32
    %c0_i32_0 = arith.constant 0 : i32
    %c0_i32_1 = arith.constant 0 : i32
    return %c0_i32, %c0_i32_0 : i32, i32
  }
  func.func @transform_3(%arg0: i32) -> (i32, i32) {
    %c0_i32 = arith.constant 0 : i32
    %c0_i32_0 = arith.constant 0 : i32
    %c0_i32_1 = arith.constant 0 : i32
    return %c0_i32, %c0_i32_0 : i32, i32
  }
  func.func @transform_4(%arg0: i32) -> (i32, i32, i32) {
    %c0_i32 = arith.constant 0 : i32
    %c0_i32_0 = arith.constant 0 : i32
    %c0_i32_1 = arith.constant 0 : i32
    return %arg0, %c0_i32, %c0_i32_0 : i32, i32, i32
  }
}

</mosaic_0001>

<llo_original>
// kernel: tpu_custom_call.1
$region0: #{tpu_custom_call.1}
  #allocation0 [shape = 'u32[]', space=smem, size = 0x4, offset = 0x4, fixed_abs, tag = 'smem constant byte address 0x4 - core index']
  #allocation1 [shape = 'u32[144,128]{1,0:T(1,128)}', space=vmem, size = 0x12000, scoped, tag = 'internal scratch']
  %s0 = inlined_call_operand.hbm [shape: f32[2,8,32], index: 0, kind: input, shape index: {}]
  %s1 = inlined_call_operand.hbm [shape: f32[32,96], index: 1, kind: input, shape index: {}]
  %s2 = inlined_call_operand.hbm [shape: f32[32,32], index: 2, kind: input, shape index: {}]
  %s3 = inlined_call_operand.vmem [shape: f32[1,32], index: 3, kind: input, shape index: {}]
  %s4 = inlined_call_operand.hbm [shape: f32[2,8,32], index: 4, kind: output, shape index: {}]
  %s5 = sld [smem:[#allocation0]]
  $region61: #{tpu_custom_call.1} parent=0
    _
  %s7 = ssub.s32 1, %s5
  %s8 = scalar_select 0, %s7, %s5
  $region1: #{tpu_custom_call.1} parent=0
    #allocation2 [shape = 'u8[8192]{0}', space=vmem, size = 0x2000, scoped, tag = 'input window, operand 0']
    #allocation3 [shape = 's32[2]{0}', space=sflag, size = 0x8, scoped, tag = 'scoped memory for tpu_custom_call.1']
    #allocation4 [shape = 's32[2]{0}', space=sflag, size = 0x8, scoped, tag = 'scoped memory for tpu_custom_call.1']
    #allocation5 [shape = 'u8[16384]{0}', space=vmem, size = 0x4000, scoped, tag = 'input window, operand 1, single buffered']
    #allocation6 [shape = 's32[1]{0}', space=sflag, size = 0x4, scoped, tag = 'scoped memory for tpu_custom_call.1']
    #allocation7 [shape = 'u8[16384]{0}', space=vmem, size = 0x4000, scoped, tag = 'input window, operand 2, single buffered']
    #allocation8 [shape = 'u8[8192]{0}', space=vmem, size = 0x2000, scoped, tag = 'output window, operand 0']
    %9 = vsyncpa [#allocation3], 0
    %s10 = scalar_lea.sflag [#allocation3], 1
    %11 = vsyncpa %s10, 0
    %12 = vsyncpa [#allocation6], 0
    %13 = vsyncpa [#allocation4], 0
    %s14 = scalar_lea.sflag [#allocation4], 1
    %15 = vsyncpa %s14, 0
    loop: start=0, step=1, limit=4
    $region2: #{tpu_custom_call.1} parent=1 // loop_pre_header
      _
    $region3: #{tpu_custom_call.1} parent=1 // loop_header
      %s17 = sphi 0, %s21
      %p18 = scmp.ge.s32.totalorder %s17, 4
      %s27 = sphi 0, %s29
      %s30 = sphi 0, %s27
      %s31 = sphi 0, %s30
      %s47 = sphi 0, %s31
      %s51 = sphi 0, %s51
      %s53 = sphi 0, %s51
      %s54 = sphi 0, %s53
      %s68 = sphi 0, %s54
      %s72 = sphi 0, %s72
      %s74 = sphi 0, %s72
      %s75 = sphi 0, %s74
      %s89 = sphi 0, %s75
      %s93 = sphi 0, %s93
      %s95 = sphi 0, %s93
      %s96 = sphi 0, %s95
      %s110 = sphi 0, %s96
      %s116 = sphi 0, %s118
      %s119 = sphi 0, %s116
      %s120 = sphi 0, %s119
      %s136 = sphi 0, %s120
    $region4: #{tpu_custom_call.1} parent=1 // loop_header_branch
      %20 = sbr.rel (%p18) target = $region8
    $region5: #{tpu_custom_call.1} parent=1 // loop_body
      %s22 = ssub.s32 %s17, 1
      %s23 = ssub.s32 %s17, 2
      %s24 = sadd.s32 %s17, 1
      %s25 = ssub.s32 %s17, %s24
      %p26 = scmp.eq.s32.totalorder %s25, 0
      %s28 = sadd.s32 %s27, 1
      %s29 = scalar_select %p26, %s27, %s28
      %p32 = pneg %p26
      %p33 = scmp.eq.s32.totalorder %s17, 1
      %p34 = por %p32, %p33
      %p35 = scmp.ne.s32.totalorder %s27, %s30
      %p36 = scmp.eq.s32.totalorder %s17, 0
      %p37 = por %p35, %p36
      %p38 = scmp.ne.s32.totalorder %s27, %s30
      %p39 = scmp.eq.s32.totalorder %s22, 1
      %p40 = por %p38, %p39
      %p41 = scmp.ne.s32.totalorder %s30, %s31
      %p42 = scmp.eq.s32.totalorder %s22, 0
      %p43 = por %p41, %p42
      %p44 = scmp.ne.s32.totalorder %s30, %s31
      %p45 = scmp.eq.s32.totalorder %s23, 1
      %p46 = por %p44, %p45
      %p48 = scmp.ne.s32.totalorder %s31, %s47
      %p49 = scmp.eq.s32.totalorder %s23, 0
      %p50 = por %p48, %p49
      %s52 = sadd.s32 %s51, 1
      %p55 = scmp.eq.s32.totalorder %s17, 1
      %p56 = scmp.ne.s32.totalorder %s51, %s53
      %p57 = scmp.eq.s32.totalorder %s17, 0
      %p58 = por %p56, %p57
      %p59 = scmp.ne.s32.totalorder %s51, %s53
      %p60 = scmp.eq.s32.totalorder %s22, 1
      %p61 = por %p59, %p60
      %p62 = scmp.ne.s32.totalorder %s53, %s54
      %p63 = scmp.eq.s32.totalorder %s22, 0
      %p64 = por %p62, %p63
      %p65 = scmp.ne.s32.totalorder %s53, %s54
      %p66 = scmp.eq.s32.totalorder %s23, 1
      %p67 = por %p65, %p66
      %p69 = scmp.ne.s32.totalorder %s54, %s68
      %p70 = scmp.eq.s32.totalorder %s23, 0
      %p71 = por %p69, %p70
      %s73 = sadd.s32 %s72, 1
      %p76 = scmp.eq.s32.totalorder %s17, 1
      %p77 = scmp.ne.s32.totalorder %s72, %s74
      %p78 = scmp.eq.s32.totalorder %s17, 0
      %p79 = por %p77, %p78
      %p80 = scmp.ne.s32.totalorder %s72, %s74
      %p81 = scmp.eq.s32.totalorder %s22, 1
      %p82 = por %p80, %p81
      %p83 = scmp.ne.s32.totalorder %s74, %s75
      %p84 = scmp.eq.s32.totalorder %s22, 0
      %p85 = por %p83, %p84
      %p86 = scmp.ne.s32.totalorder %s74, %s75
      %p87 = scmp.eq.s32.totalorder %s23, 1
      %p88 = por %p86, %p87
      %p90 = scmp.ne.s32.totalorder %s75, %s89
      %p91 = scmp.eq.s32.totalorder %s23, 0
      %p92 = por %p90, %p91
      %s94 = sadd.s32 %s93, 1
      %p97 = scmp.eq.s32.totalorder %s17, 1
      %p98 = scmp.ne.s32.totalorder %s93, %s95
      %p99 = scmp.eq.s32.totalorder %s17, 0
      %p100 = por %p98, %p99
      %p101 = scmp.ne.s32.totalorder %s93, %s95
      %p102 = scmp.eq.s32.totalorder %s22, 1
      %p103 = por %p101, %p102
      %p104 = scmp.ne.s32.totalorder %s95, %s96
      %p105 = scmp.eq.s32.totalorder %s22, 0
      %p106 = por %p104, %p105
      %p107 = scmp.ne.s32.totalorder %s95, %s96
      %p108 = scmp.eq.s32.totalorder %s23, 1
      %p109 = por %p107, %p108
      %p111 = scmp.ne.s32.totalorder %s96, %s110
      %p112 = scmp.eq.s32.totalorder %s23, 0
      %p113 = por %p111, %p112
      %s114 = ssub.s32 %s17, %s24
      %p115 = scmp.eq.s32.totalorder %s114, 0
      %s117 = sadd.s32 %s116, 1
      %s118 = scalar_select %p115, %s116, %s117
      %p121 = pneg %p115
      %p122 = scmp.eq.s32.totalorder %s17, 1
      %p123 = por %p121, %p122
      %p124 = scmp.ne.s32.totalorder %s116, %s119
      %p125 = scmp.eq.s32.totalorder %s17, 0
      %p126 = por %p124, %p125
      %p127 = scmp.ne.s32.totalorder %s116, %s119
      %p128 = scmp.eq.s32.totalorder %s22, 1
      %p129 = por %p127, %p128
      %p130 = scmp.ne.s32.totalorder %s119, %s120
      %p131 = scmp.eq.s32.totalorder %s22, 0
      %p132 = por %p130, %p131
      %p133 = scmp.ne.s32.totalorder %s119, %s120
      %p134 = scmp.eq.s32.totalorder %s23, 1
      %p135 = por %p133, %p134
      %p137 = scmp.ne.s32.totalorder %s120, %s136
      %p138 = scmp.eq.s32.totalorder %s23, 0
      %p139 = por %p137, %p138
      %p140 = scmp.le.s32.totalorder 1, %s17
      %p141 = scmp.lt.s32.totalorder %s17, 3
      %p142 = pnand %p140, %p141
      %p143 = pneg %p142
      // Predicated region
      $region9: #{tpu_custom_call.1} parent=5 // pred_check
        _
      $region10: #{tpu_custom_call.1} parent=5 // pred_check_branch
        %145 = sbr.rel (%p142) target = $region12
      $region11: #{tpu_custom_call.1} parent=5 // pred_region
        %s146 = ssub.s32 %s17, 1
        // Predicated region
        $region13: #{tpu_custom_call.1} parent=11 // pred_check
          %p147 = pneg %p64
        $region14: #{tpu_custom_call.1} parent=11 // pred_check_branch
          %149 = sbr.rel (%p147) target = $region16
        $region15: #{tpu_custom_call.1} parent=11 // pred_region
          %s151 = ssub.s32 512, 512
          %152 = vsyncadd [#allocation6], %s151
          %s153 = sshll.u32 [#allocation5], 4
          %s154 = int_to_ptr.vmem [resolvable:$true] %s153
          %159 = dma.hbm_to_vmem [thread:$0]  %s1, 512, %s154, [#allocation6], 128, 128, 8
        $region16: #{tpu_custom_call.1} parent=11 // pred_fallthru
          _
        // Predicated region
        $region17: #{tpu_custom_call.1} parent=11 // pred_check
          %p160 = pneg %p85
        $region18: #{tpu_custom_call.1} parent=11 // pred_check_branch
          %162 = sbr.rel (%p160) target = $region20
        $region19: #{tpu_custom_call.1} parent=11 // pred_region
          %s164 = ssub.s32 512, 512
          %165 = vsyncadd [#allocation6], %s164
          %s166 = sshll.u32 [#allocation7], 4
          %s167 = int_to_ptr.vmem [resolvable:$true] %s166
          %172 = dma.hbm_to_vmem [thread:$0]  %s2, 512, %s167, [#allocation6], 128, 128, 8
        $region20: #{tpu_custom_call.1} parent=11 // pred_fallthru
          _
        // Predicated region
        $region21: #{tpu_custom_call.1} parent=11 // pred_check
          %p173 = pneg %p106
        $region22: #{tpu_custom_call.1} parent=11 // pred_check_branch
          %175 = sbr.rel (%p173) target = $region24
        $region23: #{tpu_custom_call.1} parent=11 // pred_region
          _
        $region24: #{tpu_custom_call.1} parent=11 // pred_fallthru
          _
      $region12: #{tpu_custom_call.1} parent=5 // pred_fallthru
        _
      %p176 = scmp.lt.s32.totalorder %s17, 2
      // Predicated region
      $region25: #{tpu_custom_call.1} parent=5 // pred_check
        %p177 = pneg %p176
      $region26: #{tpu_custom_call.1} parent=5 // pred_check_branch
        %179 = sbr.rel (%p177) target = $region28
      $region27: #{tpu_custom_call.1} parent=5 // pred_region
        // Predicated region
        $region29: #{tpu_custom_call.1} parent=27 // pred_check
          %p180 = pneg %p37
        $region30: #{tpu_custom_call.1} parent=27 // pred_check_branch
          %182 = sbr.rel (%p180) target = $region32
        $region31: #{tpu_custom_call.1} parent=27 // pred_region
          %s183 = sand.u32 %s27, 1
          %s184 = scalar_lea.sflag [#allocation3], %s183
          %s185 = sand.u32 %s27, 1
          %s186 = smul.addr %s185, 8
          %s187 = scalar_lea.vmem [#allocation2], %s186
          %s189 = ssub.s32 128, 128
          %190 = vsyncadd %s184, %s189
          %s191 = smul.addr %s17, 128
          %s192 = scalar_lea.hbm %s0, %s191
          %s194 = sshll.u32 %s187, 4
          %s195 = int_to_ptr.vmem [resolvable:$true] %s194
          %197 = dma.hbm_to_vmem [thread:$0]  %s192, 128, %s195, %s184
        $region32: #{tpu_custom_call.1} parent=27 // pred_fallthru
          _
      $region28: #{tpu_custom_call.1} parent=5 // pred_fallthru
        _
      %p198 = scmp.le.s32.totalorder 1, %s17
      %p199 = scmp.lt.s32.totalorder %s17, 3
      %p200 = pnand %p198, %p199
      %p201 = pneg %p200
      // Predicated region
      $region33: #{tpu_custom_call.1} parent=5 // pred_check
        _
      $region34: #{tpu_custom_call.1} parent=5 // pred_check_branch
        %203 = sbr.rel (%p200) target = $region36
      $region35: #{tpu_custom_call.1} parent=5 // pred_region
        %s204 = ssub.s32 %s17, 1
        %s205 = sand.u32 %s30, 1
        %s206 = scalar_lea.sflag [#allocation3], %s205
        %s207 = sand.u32 %s30, 1
        %s208 = smul.addr %s207, 8
        %s209 = scalar_lea.vmem [#allocation2], %s208
        // Predicated region
        $region37: #{tpu_custom_call.1} parent=35 // pred_check
          %p210 = pneg %p43
        $region38: #{tpu_custom_call.1} parent=35 // pred_check_branch
          %212 = sbr.rel (%p210) target = $region40
        $region39: #{tpu_custom_call.1} parent=35 // pred_region
          %213 = dma.done %s206, 128
        $region40: #{tpu_custom_call.1} parent=35 // pred_fallthru
          _
        // Predicated region
        $region41: #{tpu_custom_call.1} parent=35 // pred_check
          %p214 = pneg %p64
        $region42: #{tpu_custom_call.1} parent=35 // pred_check_branch
          %216 = sbr.rel (%p214) target = $region44
        $region43: #{tpu_custom_call.1} parent=35 // pred_region
          %217 = dma.done [#allocation6], 512
        $region44: #{tpu_custom_call.1} parent=35 // pred_fallthru
          _
        // Predicated region
        $region45: #{tpu_custom_call.1} parent=35 // pred_check
          %p218 = pneg %p85
        $region46: #{tpu_custom_call.1} parent=35 // pred_check_branch
          %220 = sbr.rel (%p218) target = $region48
        $region47: #{tpu_custom_call.1} parent=35 // pred_region
          %221 = dma.done [#allocation6], 512
        $region48: #{tpu_custom_call.1} parent=35 // pred_fallthru
          _
        %s222 = sand.u32 %s30, 1
        %s223 = scalar_lea.sflag [#allocation3], %s222
        %s224 = sand.u32 %s30, 1
        %s225 = smul.addr %s224, 8
        %s226 = scalar_lea.vmem [#allocation2], %s225
        %p227 = pneg %p43
        %p228 = pneg %p40
        %p229 = pneg %p64
        %p230 = pneg %p61
        %p231 = pneg %p85
        %p232 = pneg %p82
        %p233 = pneg %p106
        %p234 = pneg %p103
        %p235 = pneg %p132
        %p236 = pneg %p129
        %s237 = sand.u32 %s119, 1
        %s238 = scalar_lea.sflag [#allocation4], %s237
        %s239 = sand.u32 %s119, 1
        %s240 = smul.addr %s239, 8
        %s241 = scalar_lea.vmem [#allocation8], %s240
        %v242 = vld [vmem:[%s209] sm:$0xff]
        %v243 = vld [vmem:[#allocation5] sm:$0xff]
        %v244 = vld [vmem:[#allocation5 + $0x8] sm:$0xff]
        %v245 = vld [vmem:[#allocation5 + $0x10] sm:$0xff]
        %v246 = vld [vmem:[#allocation5 + $0x18] sm:$0xff]
        %vm247 = vcmask 261120
        %v249 = vsel %vm247, %v242, 0
        %251 = vmatprep.subr.mxu0 0.0
        %252 = vmatpush1.msra.mxu0 0.0
        %253 = vmatprep.subr.mxu0 0.0
        %254 = vmatpush1.msra.mxu0 0.0
        %255 = vmatprep.subr.mxu0 0.0
        %256 = vmatpush1.msra.mxu0 0.0
        %257 = vmatprep.subr.mxu0 0.0
        %258 = vmatpush1.msra.mxu0 0.0
        %259 = vmatprep.subr.mxu0 0.0
        %260 = vmatpush1.msra.mxu0 0.0
        %261 = vmatprep.subr.mxu0 0.0
        %262 = vmatpush1.msra.mxu0 0.0
        %263 = vmatprep.subr.mxu0 0.0
        %264 = vmatpush1.msra.mxu0 0.0
        %265 = vmatprep.subr.mxu0 0.0
        %266 = vmatpush1.msra.mxu0 0.0
        %267 = vmatprep.subr.mxu0 0.0
        %268 = vmatpush1.msra.mxu0 0.0
        %269 = vmatprep.subr.mxu0 0.0
        %270 = vmatpush1.msra.mxu0 0.0
        %271 = vmatprep.subr.mxu0 0.0
        %272 = vmatpush1.msra.mxu0 0.0
        %273 = vmatprep.subr.mxu0 0.0
        %274 = vmatpush1.msra.mxu0 0.0
        %275 = vmatprep.subr.mxu0 0.0
        %276 = vmatpush1.msra.mxu0 %v246
        %277 = vmatprep.subr.mxu0 0.0
        %278 = vmatpush1.msra.mxu0 %v245
        %279 = vmatprep.subr.mxu0 0.0
        %280 = vmatpush1.msra.mxu0 %v244
        %281 = vmatprep.subr.mxu0 0.0
        %282 = vmatpush1.msra.mxu0 %v243
        %283 = vmatprep.subr.mxu0 0.0
        %284 = vmatpush2.msra.mxu0 0.0
        %285 = vmatprep.subr.mxu0 0.0
        %286 = vmatpush2.msra.mxu0 0.0
        %287 = vmatprep.subr.mxu0 0.0
        %288 = vmatpush2.msra.mxu0 0.0
        %289 = vmatprep.subr.mxu0 0.0
        %290 = vmatpush2.msra.mxu0 0.0
        %291 = vmatprep.subr.mxu0 0.0
        %292 = vmatpush2.msra.mxu0 0.0
        %293 = vmatprep.subr.mxu0 0.0
        %294 = vmatpush2.msra.mxu0 0.0
        %295 = vmatprep.subr.mxu0 0.0
        %296 = vmatpush2.msra.mxu0 0.0
        %297 = vmatprep.subr.mxu0 0.0
        %298 = vmatpush2.msra.mxu0 0.0
        %299 = vmatprep.subr.mxu0 0.0
        %300 = vmatpush2.msra.mxu0 0.0
        %301 = vmatprep.subr.mxu0 0.0
        %302 = vmatpush2.msra.mxu0 0.0
        %303 = vmatprep.subr.mxu0 0.0
        %304 = vmatpush2.msra.mxu0 0.0
        %305 = vmatprep.subr.mxu0 0.0
        %306 = vmatpush2.msra.mxu0 0.0
        %307 = vmatprep.subr.mxu0 0.0
        %308 = vmatpush2.msra.mxu0 0.0
        %309 = vmatprep.subr.mxu0 0.0
        %310 = vmatpush2.msra.mxu0 0.0
        %311 = vmatprep.subr.mxu0 0.0
        %312 = vmatpush2.msra.mxu0 0.0
        %313 = vmatprep.subr.mxu0 0.0
        %314 = vmatpush2.msra.mxu0 0.0
        %315 = vmatprep.mubr.f32.mxu0 0.0
        %316 = vmatmul.mubr.f32.gmra.mxu0 %v249
        %v317 = vpop.f32.mrf.mxu0
        %v318 = vadd.f32 0.0, %v317
        %v319 = vpop.f32.mrf.mxu0
        %320 = vdwg.mxu0
        %v321 = vlaneseq
        %v322 = vshrl.u32 %v321, 7
        %v323 = vlaneseq
        %v324 = vand.u32 %v323, 127
        %vm325 = vcmp.gt.s32.totalorder %v324, %v322
        %327 = vrot.lane.b32.xlu0 %v318, 96
        %v328 = vpop.permute.xlu0 %327
        %vm329 = vcmask 130048
        %v330 = vsel %vm329, %v318, 0
        %v332 = vsel %vm329, %v328, 0
        %334 = vmatprep.subr.mxu0 0.0
        %335 = vmatpush1.xpose.msra.mxu0 0.0
        %336 = vmatprep.subr.mxu0 0.0
        %337 = vmatpush1.xpose.msra.mxu0 0.0
        %338 = vmatprep.subr.mxu0 0.0
        %339 = vmatpush1.xpose.msra.mxu0 0.0
        %340 = vmatprep.subr.mxu0 0.0
        %341 = vmatpush1.xpose.msra.mxu0 0.0
        %342 = vmatprep.subr.mxu0 0.0
        %343 = vmatpush1.xpose.msra.mxu0 0.0
        %344 = vmatprep.subr.mxu0 0.0
        %345 = vmatpush1.xpose.msra.mxu0 0.0
        %346 = vmatprep.subr.mxu0 0.0
        %347 = vmatpush1.xpose.msra.mxu0 0.0
        %348 = vmatprep.subr.mxu0 0.0
        %349 = vmatpush1.xpose.msra.mxu0 0.0
        %350 = vmatprep.subr.mxu0 0.0
        %351 = vmatpush1.xpose.msra.mxu0 0.0
        %352 = vmatprep.subr.mxu0 0.0
        %353 = vmatpush1.xpose.msra.mxu0 0.0
        %354 = vmatprep.subr.mxu0 0.0
        %355 = vmatpush1.xpose.msra.mxu0 0.0
        %356 = vmatprep.subr.mxu0 0.0
        %357 = vmatpush1.xpose.msra.mxu0 0.0
        %358 = vmatprep.subr.mxu0 0.0
        %359 = vmatpush1.xpose.msra.mxu0 0.0
        %360 = vmatprep.subr.mxu0 0.0
        %361 = vmatpush1.xpose.msra.mxu0 0.0
        %362 = vmatprep.subr.mxu0 0.0
        %363 = vmatpush1.xpose.msra.mxu0 0.0
        %364 = vmatprep.subr.mxu0 0.0
        %365 = vmatpush1.xpose.msra.mxu0 %v332
        %366 = vmatprep.subr.mxu0 0.0
        %367 = vmatpush2.xpose.msra.mxu0 0.0
        %368 = vmatprep.subr.mxu0 0.0
        %369 = vmatpush2.xpose.msra.mxu0 0.0
        %370 = vmatprep.subr.mxu0 0.0
        %371 = vmatpush2.xpose.msra.mxu0 0.0
        %372 = vmatprep.subr.mxu0 0.0
        %373 = vmatpush2.xpose.msra.mxu0 0.0
        %374 = vmatprep.subr.mxu0 0.0
        %375 = vmatpush2.xpose.msra.mxu0 0.0
        %376 = vmatprep.subr.mxu0 0.0
        %377 = vmatpush2.xpose.msra.mxu0 0.0
        %378 = vmatprep.subr.mxu0 0.0
        %379 = vmatpush2.xpose.msra.mxu0 0.0
        %380 = vmatprep.subr.mxu0 0.0
        %381 = vmatpush2.xpose.msra.mxu0 0.0
        %382 = vmatprep.subr.mxu0 0.0
        %383 = vmatpush2.xpose.msra.mxu0 0.0
        %384 = vmatprep.subr.mxu0 0.0
        %385 = vmatpush2.xpose.msra.mxu0 0.0
        %386 = vmatprep.subr.mxu0 0.0
        %387 = vmatpush2.xpose.msra.mxu0 0.0
        %388 = vmatprep.subr.mxu0 0.0
        %389 = vmatpush2.xpose.msra.mxu0 0.0
        %390 = vmatprep.subr.mxu0 0.0
        %391 = vmatpush2.xpose.msra.mxu0 0.0
        %392 = vmatprep.subr.mxu0 0.0
        %393 = vmatpush2.xpose.msra.mxu0 0.0
        %394 = vmatprep.subr.mxu0 0.0
        %395 = vmatpush2.xpose.msra.mxu0 0.0
        %396 = vmatprep.subr.mxu0 0.0
        %397 = vmatpush2.xpose.msra.mxu0 0.0
        %398 = vmatprep.mubr.f32.mxu0 0.0
        %399 = vmatmul.mubr.f32.gmra.mxu0 %v330
        %v400 = vpop.f32.mrf.mxu0
        %v401 = vadd.f32 0.0, %v400
        %v402 = vpop.f32.mrf.mxu0
        %403 = vdwg.mxu0
        %v404 = vmul.f32 %v401, 0.25
        %v405 = vsel %vm325, -inf, %v404
        %vm406 = vcmask 64512
        %v407 = vsel %vm406, %v405, -inf
        %408 = vmax.xlane.f32.xlu0 %v407
        %v409 = vpop.xlane.xlu0 %408
        %v410 = vsub.f32 %v405, %v409
        %v411 = vmul.f32 %v410, 1.442695
        %v412 = vpow.pop %v411
        %v413 = vsel %vm406, %v412, 0.0
        %414 = vadd.xlane.f32.xlu0 %v413
        %v415 = vpop.xlane.xlu0 %414
        %v416 = vrcp.pop %v415
        %v417 = vmul.f32 %v412, %v416
        %418 = vrot.lane.b32.xlu0 %v318, 64
        %v419 = vpop.permute.xlu0 %418
        %v422 = vsel %vm406, %v417, 0
        %424 = vmatprep.subr.mxu0 0.0
        %425 = vmatpush1.msra.mxu0 0.0
        %426 = vmatprep.subr.mxu0 0.0
        %427 = vmatpush1.msra.mxu0 0.0
        %428 = vmatprep.subr.mxu0 0.0
        %429 = vmatpush1.msra.mxu0 0.0
        %430 = vmatprep.subr.mxu0 0.0
        %431 = vmatpush1.msra.mxu0 0.0
        %432 = vmatprep.subr.mxu0 0.0
        %433 = vmatpush1.msra.mxu0 0.0
        %434 = vmatprep.subr.mxu0 0.0
        %435 = vmatpush1.msra.mxu0 0.0
        %436 = vmatprep.subr.mxu0 0.0
        %437 = vmatpush1.msra.mxu0 0.0
        %438 = vmatprep.subr.mxu0 0.0
        %439 = vmatpush1.msra.mxu0 0.0
        %440 = vmatprep.subr.mxu0 0.0
        %441 = vmatpush1.msra.mxu0 0.0
        %442 = vmatprep.subr.mxu0 0.0
        %443 = vmatpush1.msra.mxu0 0.0
        %444 = vmatprep.subr.mxu0 0.0
        %445 = vmatpush1.msra.mxu0 0.0
        %446 = vmatprep.subr.mxu0 0.0
        %447 = vmatpush1.msra.mxu0 0.0
        %448 = vmatprep.subr.mxu0 0.0
        %449 = vmatpush1.msra.mxu0 0.0
        %450 = vmatprep.subr.mxu0 0.0
        %451 = vmatpush1.msra.mxu0 0.0
        %452 = vmatprep.subr.mxu0 0.0
        %453 = vmatpush1.msra.mxu0 0.0
        %454 = vmatprep.subr.mxu0 0.0
        %455 = vmatpush1.msra.mxu0 %v419
        %456 = vmatprep.subr.mxu0 0.0
        %457 = vmatpush2.msra.mxu0 0.0
        %458 = vmatprep.subr.mxu0 0.0
        %459 = vmatpush2.msra.mxu0 0.0
        %460 = vmatprep.subr.mxu0 0.0
        %461 = vmatpush2.msra.mxu0 0.0
        %462 = vmatprep.subr.mxu0 0.0
        %463 = vmatpush2.msra.mxu0 0.0
        %464 = vmatprep.subr.mxu0 0.0
        %465 = vmatpush2.msra.mxu0 0.0
        %466 = vmatprep.subr.mxu0 0.0
        %467 = vmatpush2.msra.mxu0 0.0
        %468 = vmatprep.subr.mxu0 0.0
        %469 = vmatpush2.msra.mxu0 0.0
        %470 = vmatprep.subr.mxu0 0.0
        %471 = vmatpush2.msra.mxu0 0.0
        %472 = vmatprep.subr.mxu0 0.0
        %473 = vmatpush2.msra.mxu0 0.0
        %474 = vmatprep.subr.mxu0 0.0
        %475 = vmatpush2.msra.mxu0 0.0
        %476 = vmatprep.subr.mxu0 0.0
        %477 = vmatpush2.msra.mxu0 0.0
        %478 = vmatprep.subr.mxu0 0.0
        %479 = vmatpush2.msra.mxu0 0.0
        %480 = vmatprep.subr.mxu0 0.0
        %481 = vmatpush2.msra.mxu0 0.0
        %482 = vmatprep.subr.mxu0 0.0
        %483 = vmatpush2.msra.mxu0 0.0
        %484 = vmatprep.subr.mxu0 0.0
        %485 = vmatpush2.msra.mxu0 0.0
        %486 = vmatprep.subr.mxu0 0.0
        %487 = vmatpush2.msra.mxu0 0.0
        %488 = vmatprep.mubr.f32.mxu0 0.0
        %489 = vmatmul.mubr.f32.gmra.mxu0 %v422
        %v490 = vpop.f32.mrf.mxu0
        %v491 = vadd.f32 0.0, %v490
        %v492 = vpop.f32.mrf.mxu0
        %493 = vdwg.mxu0
        %494 = vrot.lane.b32.xlu0 %v318, 112
        %v495 = vpop.permute.xlu0 %494
        %496 = vrot.lane.b32.xlu0 %v318, 80
        %v497 = vpop.permute.xlu0 %496
        %v498 = vsel %vm329, %v495, 0
        %v500 = vsel %vm329, %v497, 0
        %502 = vmatprep.subr.mxu0 0.0
        %503 = vmatpush1.xpose.msra.mxu0 0.0
        %504 = vmatprep.subr.mxu0 0.0
        %505 = vmatpush1.xpose.msra.mxu0 0.0
        %506 = vmatprep.subr.mxu0 0.0
        %507 = vmatpush1.xpose.msra.mxu0 0.0
        %508 = vmatprep.subr.mxu0 0.0
        %509 = vmatpush1.xpose.msra.mxu0 0.0
        %510 = vmatprep.subr.mxu0 0.0
        %511 = vmatpush1.xpose.msra.mxu0 0.0
        %512 = vmatprep.subr.mxu0 0.0
        %513 = vmatpush1.xpose.msra.mxu0 0.0
        %514 = vmatprep.subr.mxu0 0.0
        %515 = vmatpush1.xpose.msra.mxu0 0.0
        %516 = vmatprep.subr.mxu0 0.0
        %517 = vmatpush1.xpose.msra.mxu0 0.0
        %518 = vmatprep.subr.mxu0 0.0
        %519 = vmatpush1.xpose.msra.mxu0 0.0
        %520 = vmatprep.subr.mxu0 0.0
        %521 = vmatpush1.xpose.msra.mxu0 0.0
        %522 = vmatprep.subr.mxu0 0.0
        %523 = vmatpush1.xpose.msra.mxu0 0.0
        %524 = vmatprep.subr.mxu0 0.0
        %525 = vmatpush1.xpose.msra.mxu0 0.0
        %526 = vmatprep.subr.mxu0 0.0
        %527 = vmatpush1.xpose.msra.mxu0 0.0
        %528 = vmatprep.subr.mxu0 0.0
        %529 = vmatpush1.xpose.msra.mxu0 0.0
        %530 = vmatprep.subr.mxu0 0.0
        %531 = vmatpush1.xpose.msra.mxu0 0.0
        %532 = vmatprep.subr.mxu0 0.0
        %533 = vmatpush1.xpose.msra.mxu0 %v500
        %534 = vmatprep.subr.mxu0 0.0
        %535 = vmatpush2.xpose.msra.mxu0 0.0
        %536 = vmatprep.subr.mxu0 0.0
        %537 = vmatpush2.xpose.msra.mxu0 0.0
        %538 = vmatprep.subr.mxu0 0.0
        %539 = vmatpush2.xpose.msra.mxu0 0.0
        %540 = vmatprep.subr.mxu0 0.0
        %541 = vmatpush2.xpose.msra.mxu0 0.0
        %542 = vmatprep.subr.mxu0 0.0
        %543 = vmatpush2.xpose.msra.mxu0 0.0
        %544 = vmatprep.subr.mxu0 0.0
        %545 = vmatpush2.xpose.msra.mxu0 0.0
        %546 = vmatprep.subr.mxu0 0.0
        %547 = vmatpush2.xpose.msra.mxu0 0.0
        %548 = vmatprep.subr.mxu0 0.0
        %549 = vmatpush2.xpose.msra.mxu0 0.0
        %550 = vmatprep.subr.mxu0 0.0
        %551 = vmatpush2.xpose.msra.mxu0 0.0
        %552 = vmatprep.subr.mxu0 0.0
        %553 = vmatpush2.xpose.msra.mxu0 0.0
        %554 = vmatprep.subr.mxu0 0.0
        %555 = vmatpush2.xpose.msra.mxu0 0.0
        %556 = vmatprep.subr.mxu0 0.0
        %557 = vmatpush2.xpose.msra.mxu0 0.0
        %558 = vmatprep.subr.mxu0 0.0
        %559 = vmatpush2.xpose.msra.mxu0 0.0
        %560 = vmatprep.subr.mxu0 0.0
        %561 = vmatpush2.xpose.msra.mxu0 0.0
        %562 = vmatprep.subr.mxu0 0.0
        %563 = vmatpush2.xpose.msra.mxu0 0.0
        %564 = vmatprep.subr.mxu0 0.0
        %565 = vmatpush2.xpose.msra.mxu0 0.0
        %566 = vmatprep.mubr.f32.mxu0 0.0
        %567 = vmatmul.mubr.f32.gmra.mxu0 %v498
        %v568 = vpop.f32.mrf.mxu0
        %v569 = vadd.f32 0.0, %v568
        %v570 = vpop.f32.mrf.mxu0
        %571 = vdwg.mxu0
        %v572 = vmul.f32 %v569, 0.25
        %v573 = vsel %vm325, -inf, %v572
        %v574 = vsel %vm406, %v573, -inf
        %575 = vmax.xlane.f32.xlu0 %v574
        %v576 = vpop.xlane.xlu0 %575
        %v577 = vsub.f32 %v573, %v576
        %v578 = vmul.f32 %v577, 1.442695
        %v579 = vpow.pop %v578
        %v580 = vsel %vm406, %v579, 0.0
        %581 = vadd.xlane.f32.xlu0 %v580
        %v582 = vpop.xlane.xlu0 %581
        %v583 = vrcp.pop %v582
        %v584 = vmul.f32 %v579, %v583
        %585 = vrot.lane.b32.xlu0 %v318, 48
        %v586 = vpop.permute.xlu0 %585
        %v589 = vsel %vm406, %v584, 0
        %591 = vmatprep.subr.mxu0 0.0
        %592 = vmatpush1.msra.mxu0 0.0
        %593 = vmatprep.subr.mxu0 0.0
        %594 = vmatpush1.msra.mxu0 0.0
        %595 = vmatprep.subr.mxu0 0.0
        %596 = vmatpush1.msra.mxu0 0.0
        %597 = vmatprep.subr.mxu0 0.0
        %598 = vmatpush1.msra.mxu0 0.0
        %599 = vmatprep.subr.mxu0 0.0
        %600 = vmatpush1.msra.mxu0 0.0
        %601 = vmatprep.subr.mxu0 0.0
        %602 = vmatpush1.msra.mxu0 0.0
        %603 = vmatprep.subr.mxu0 0.0
        %604 = vmatpush1.msra.mxu0 0.0
        %605 = vmatprep.subr.mxu0 0.0
        %606 = vmatpush1.msra.mxu0 0.0
        %607 = vmatprep.subr.mxu0 0.0
        %608 = vmatpush1.msra.mxu0 0.0
        %609 = vmatprep.subr.mxu0 0.0
        %610 = vmatpush1.msra.mxu0 0.0
        %611 = vmatprep.subr.mxu0 0.0
        %612 = vmatpush1.msra.mxu0 0.0
        %613 = vmatprep.subr.mxu0 0.0
        %614 = vmatpush1.msra.mxu0 0.0
        %615 = vmatprep.subr.mxu0 0.0
        %616 = vmatpush1.msra.mxu0 0.0
        %617 = vmatprep.subr.mxu0 0.0
        %618 = vmatpush1.msra.mxu0 0.0
        %619 = vmatprep.subr.mxu0 0.0
        %620 = vmatpush1.msra.mxu0 0.0
        %621 = vmatprep.subr.mxu0 0.0
        %622 = vmatpush1.msra.mxu0 %v586
        %623 = vmatprep.subr.mxu0 0.0
        %624 = vmatpush2.msra.mxu0 0.0
        %625 = vmatprep.subr.mxu0 0.0
        %626 = vmatpush2.msra.mxu0 0.0
        %627 = vmatprep.subr.mxu0 0.0
        %628 = vmatpush2.msra.mxu0 0.0
        %629 = vmatprep.subr.mxu0 0.0
        %630 = vmatpush2.msra.mxu0 0.0
        %631 = vmatprep.subr.mxu0 0.0
        %632 = vmatpush2.msra.mxu0 0.0
        %633 = vmatprep.subr.mxu0 0.0
        %634 = vmatpush2.msra.mxu0 0.0
        %635 = vmatprep.subr.mxu0 0.0
        %636 = vmatpush2.msra.mxu0 0.0
        %637 = vmatprep.subr.mxu0 0.0
        %638 = vmatpush2.msra.mxu0 0.0
        %639 = vmatprep.subr.mxu0 0.0
        %640 = vmatpush2.msra.mxu0 0.0
        %641 = vmatprep.subr.mxu0 0.0
        %642 = vmatpush2.msra.mxu0 0.0
        %643 = vmatprep.subr.mxu0 0.0
        %644 = vmatpush2.msra.mxu0 0.0
        %645 = vmatprep.subr.mxu0 0.0
        %646 = vmatpush2.msra.mxu0 0.0
        %647 = vmatprep.subr.mxu0 0.0
        %648 = vmatpush2.msra.mxu0 0.0
        %649 = vmatprep.subr.mxu0 0.0
        %650 = vmatpush2.msra.mxu0 0.0
        %651 = vmatprep.subr.mxu0 0.0
        %652 = vmatpush2.msra.mxu0 0.0
        %653 = vmatprep.subr.mxu0 0.0
        %654 = vmatpush2.msra.mxu0 0.0
        %655 = vmatprep.mubr.f32.mxu0 0.0
        %656 = vmatmul.mubr.f32.gmra.mxu0 %v589
        %v657 = vpop.f32.mrf.mxu0
        %v658 = vadd.f32 0.0, %v657
        %v659 = vpop.f32.mrf.mxu0
        %660 = vdwg.mxu0
        %662 = vrot.lane.b32.xlu0 %v658, 16
        %v663 = vpop.permute.xlu0 %662
        %v665 = vsel %vm329, %v491, %v663
        %v666 = vld [vmem:[#allocation7] sm:$0xff]
        %v667 = vld [vmem:[#allocation7 + $0x8] sm:$0xff]
        %v668 = vld [vmem:[#allocation7 + $0x10] sm:$0xff]
        %v669 = vld [vmem:[#allocation7 + $0x18] sm:$0xff]
        %v670 = vld [vmem:[%s3] sm:$0x1]
        %v672 = vlaneseq
        %v673 = vshrl.u32 %v672, 7
        %v674 = vsub.s32 0, %v673
        %v675 = vrot.slane %v670, %v674
        %v678 = vsel %vm247, %v665, 0
        %680 = vmatprep.subr.mxu0 0.0
        %681 = vmatpush1.msra.mxu0 0.0
        %682 = vmatprep.subr.mxu0 0.0
        %683 = vmatpush1.msra.mxu0 0.0
        %684 = vmatprep.subr.mxu0 0.0
        %685 = vmatpush1.msra.mxu0 0.0
        %686 = vmatprep.subr.mxu0 0.0
        %687 = vmatpush1.msra.mxu0 0.0
        %688 = vmatprep.subr.mxu0 0.0
        %689 = vmatpush1.msra.mxu0 0.0
        %690 = vmatprep.subr.mxu0 0.0
        %691 = vmatpush1.msra.mxu0 0.0
        %692 = vmatprep.subr.mxu0 0.0
        %693 = vmatpush1.msra.mxu0 0.0
        %694 = vmatprep.subr.mxu0 0.0
        %695 = vmatpush1.msra.mxu0 0.0
        %696 = vmatprep.subr.mxu0 0.0
        %697 = vmatpush1.msra.mxu0 0.0
        %698 = vmatprep.subr.mxu0 0.0
        %699 = vmatpush1.msra.mxu0 0.0
        %700 = vmatprep.subr.mxu0 0.0
        %701 = vmatpush1.msra.mxu0 0.0
        %702 = vmatprep.subr.mxu0 0.0
        %703 = vmatpush1.msra.mxu0 0.0
        %704 = vmatprep.subr.mxu0 0.0
        %705 = vmatpush1.msra.mxu0 %v669
        %706 = vmatprep.subr.mxu0 0.0
        %707 = vmatpush1.msra.mxu0 %v668
        %708 = vmatprep.subr.mxu0 0.0
        %709 = vmatpush1.msra.mxu0 %v667
        %710 = vmatprep.subr.mxu0 0.0
        %711 = vmatpush1.msra.mxu0 %v666
        %712 = vmatprep.subr.mxu0 0.0
        %713 = vmatpush2.msra.mxu0 0.0
        %714 = vmatprep.subr.mxu0 0.0
        %715 = vmatpush2.msra.mxu0 0.0
        %716 = vmatprep.subr.mxu0 0.0
        %717 = vmatpush2.msra.mxu0 0.0
        %718 = vmatprep.subr.mxu0 0.0
        %719 = vmatpush2.msra.mxu0 0.0
        %720 = vmatprep.subr.mxu0 0.0
        %721 = vmatpush2.msra.mxu0 0.0
        %722 = vmatprep.subr.mxu0 0.0
        %723 = vmatpush2.msra.mxu0 0.0
        %724 = vmatprep.subr.mxu0 0.0
        %725 = vmatpush2.msra.mxu0 0.0
        %726 = vmatprep.subr.mxu0 0.0
        %727 = vmatpush2.msra.mxu0 0.0
        %728 = vmatprep.subr.mxu0 0.0
        %729 = vmatpush2.msra.mxu0 0.0
        %730 = vmatprep.subr.mxu0 0.0
        %731 = vmatpush2.msra.mxu0 0.0
        %732 = vmatprep.subr.mxu0 0.0
        %733 = vmatpush2.msra.mxu0 0.0
        %734 = vmatprep.subr.mxu0 0.0
        %735 = vmatpush2.msra.mxu0 0.0
        %736 = vmatprep.subr.mxu0 0.0
        %737 = vmatpush2.msra.mxu0 0.0
        %738 = vmatprep.subr.mxu0 0.0
        %739 = vmatpush2.msra.mxu0 0.0
        %740 = vmatprep.subr.mxu0 0.0
        %741 = vmatpush2.msra.mxu0 0.0
        %742 = vmatprep.subr.mxu0 0.0
        %743 = vmatpush2.msra.mxu0 0.0
        %744 = vmatprep.mubr.f32.mxu0 0.0
        %745 = vmatmul.mubr.f32.gmra.mxu0 %v678
        %v746 = vpop.f32.mrf.mxu0
        %v747 = vadd.f32 %v675, %v746
        %v748 = vpop.f32.mrf.mxu0
        %749 = vdwg.mxu0
        %750 = vst.msk [vmem:[%s241] sm:$0xff] %vm247, %v747
        %s751 = sand.u32 %s119, 1
        %s752 = scalar_lea.sflag [#allocation4], %s751
        %s753 = sand.u32 %s119, 1
        %s754 = smul.addr %s753, 8
        %s755 = scalar_lea.vmem [#allocation8], %s754
        // Predicated region
        $region49: #{tpu_custom_call.1} parent=35 // pred_check
          %p756 = pneg %p129
        $region50: #{tpu_custom_call.1} parent=35 // pred_check_branch
          %758 = sbr.rel (%p756) target = $region52
        $region51: #{tpu_custom_call.1} parent=35 // pred_region
          %s760 = ssub.s32 128, 128
          %761 = vsyncadd %s752, %s760
          %s762 = smul.addr %s22, 128
          %s763 = scalar_lea.hbm %s4, %s762
          %s765 = sshll.u32 %s755, 4
          %s766 = int_to_ptr.vmem [resolvable:$true] %s765
          %768 = dma.vmem_to_hbm [thread:$0]  %s766, 128, %s763, %s752
        $region52: #{tpu_custom_call.1} parent=35 // pred_fallthru
          _
      $region36: #{tpu_custom_call.1} parent=5 // pred_fallthru
        _
      %p769 = scmp.le.s32.totalorder 2, %s17
      // Predicated region
      $region53: #{tpu_custom_call.1} parent=5 // pred_check
        %p770 = pneg %p769
      $region54: #{tpu_custom_call.1} parent=5 // pred_check_branch
        %772 = sbr.rel (%p770) target = $region56
      $region55: #{tpu_custom_call.1} parent=5 // pred_region
        %s773 = ssub.s32 %s17, 2
        // Predicated region
        $region57: #{tpu_custom_call.1} parent=55 // pred_check
          %p774 = pneg %p135
        $region58: #{tpu_custom_call.1} parent=55 // pred_check_branch
          %776 = sbr.rel (%p774) target = $region60
        $region59: #{tpu_custom_call.1} parent=55 // pred_region
          %s777 = sand.u32 %s120, 1
          %s778 = scalar_lea.sflag [#allocation4], %s777
          %s779 = sand.u32 %s120, 1
          %s780 = smul.addr %s779, 8
          %s781 = scalar_lea.vmem [#allocation8], %s780
          %782 = dma.done %s778, 128
        $region60: #{tpu_custom_call.1} parent=55 // pred_fallthru
          _
      $region56: #{tpu_custom_call.1} parent=5 // pred_fallthru
        _
    $region6: #{tpu_custom_call.1} parent=1 // loop_footer
      %s21 = sadd.s32 1, %s17
    $region7: #{tpu_custom_call.1} parent=1 // loop_footer_branch
      %16 = sbr.rel target = $region3
    $region8: #{tpu_custom_call.1} parent=1 // loop_exit
      _
    %783 = vsyncpa [#allocation3], 1
    %s784 = scalar_lea.sflag [#allocation3], 1
    %785 = vsyncpa %s784, 1
    %786 = vsyncpa [#allocation6], 1
    %787 = vsyncpa [#allocation4], 1
    %s788 = scalar_lea.sflag [#allocation4], 1
    %789 = vsyncpa %s788, 1

</llo_original>
